<compile_context>
chip_gen: v5e
topology: v5e:2x2
jax: 0.10.0
libtpu: 0.0.40
codegen_flags: <defaults>
</compile_context>

<pallas_src>
import jax
import jax.numpy as jnp
from jax.experimental import pallas as pl
from jax.experimental.pallas import tpu as pltpu

C_PAD = 128  # lane-dense padded class dimension (multiple of 128 lanes)


def _full_spec(shape):
    # one block == the full array (exempt from the (8,128) divisibility rule)
    return pl.BlockSpec(shape, lambda: tuple(0 for _ in shape))


def text_linear_merge_kernel(
    x_ref, xs_ref,          # activations        : [B, D_in] f32, [B, S] f32
    wa_ref, wb_ref, b_ref,  # folded hidden layer: [D_in,512] bf16, [S,512] bf16, [1,512] f32
    wf_ref, bf_ref,         # padded fc          : [512, 128] bf16, [1, 128] f32 (-inf pads)
    o_ref,                  # output             : [B, 128] f32
):
    # merged = fc0(cat(bertlinear(x), linear_struct(xs)))  (pre-folded weights)
    x_bf = x_ref[...].astype(jnp.bfloat16)
    xs_bf = xs_ref[...].astype(jnp.bfloat16)
    merged = (jnp.dot(x_bf, wa_ref[...], preferred_element_type=jnp.float32)
              + jnp.dot(xs_bf, wb_ref[...], preferred_element_type=jnp.float32)
              + b_ref[...])
    # fc -> logits (padded lanes get bias -inf, so softmax sends them to 0)
    logits = jnp.dot(merged.astype(jnp.bfloat16), wf_ref[...],
                     preferred_element_type=jnp.float32) + bf_ref[...]
    # softmax over the class axis (dim=1), f32
    m = jnp.max(logits, axis=-1, keepdims=True)
    e = jnp.exp(logits - m)
    denom = jnp.sum(e, axis=-1, keepdims=True)
    o_ref[...] = (e * pl.reciprocal(denom, approx=False)).astype(o_ref.dtype)


def text_linear_merge(x, x_struc, folded, num_class):
    wa, wb, b_fused, wf_pad, bf_pad = folded
    B = x.shape[0]
    operands = (x, x_struc, wa, wb, b_fused, wf_pad, bf_pad)
    out_pad = pl.pallas_call(
        text_linear_merge_kernel,
        out_shape=jax.ShapeDtypeStruct((B, C_PAD), jnp.float32),
        grid=(),
        in_specs=[_full_spec(a.shape) for a in operands],
        out_specs=_full_spec((B, C_PAD)),
        compiler_params=pltpu.CompilerParams(vmem_limit_bytes=32 << 20),
    )(*operands)
    return out_pad[:, :num_class]


def make_params(key, dim, max_length, struc_size, num_class):
    """Deterministic synthetic f32 parameters (layer-by-layer, PyTorch-style)."""
    d_in = dim * max_length
    ks = jax.random.split(key, 8)

    def lin(kw, kb, fin, fout):
        w = jax.random.normal(kw, (fin, fout), jnp.float32) * (1.0 / jnp.sqrt(fin))
        b = jax.random.normal(kb, (1, fout), jnp.float32) * 0.02
        return w, b

    w1, b1 = lin(ks[0], ks[1], d_in, 1024)        # bertlinear
    w2, b2 = lin(ks[2], ks[3], struc_size, 1024)  # linear_struct
    w0, b0 = lin(ks[4], ks[5], 2048, 512)         # fc0
    wf, bf = lin(ks[6], ks[7], 512, num_class)    # fc
    w0a, w0b = w0[:1024, :], w0[1024:, :]         # split for the concat fusion
    return (w1, b1, w2, b2, w0a, w0b, b0, wf, bf)


def fold_params(params, num_class):
    """Pre-fold the activation-free linear chain (f32) then cast weights to bf16."""
    (w1, b1, w2, b2, w0a, w0b, b0, wf, bf) = params
    wa = (w1 @ w0a).astype(jnp.bfloat16)                           # [D_in, 512]
    wb = (w2 @ w0b).astype(jnp.bfloat16)                           # [S,    512]
    b_fused = (b1 @ w0a + b2 @ w0b + b0).astype(jnp.float32)       # [1, 512]
    wf_pad = jnp.zeros((wf.shape[0], C_PAD), jnp.bfloat16)
    wf_pad = wf_pad.at[:, :num_class].set(wf.astype(jnp.bfloat16))  # [512, 128]
    bf_pad = jnp.full((1, C_PAD), -jnp.inf, jnp.float32)
    bf_pad = bf_pad.at[:, :num_class].set(bf)                       # [1, 128]
    return (wa, wb, b_fused, wf_pad, bf_pad)


def reference_forward(x, x_struc, params):
    """Layer-by-layer f32 reference matching the PyTorch module."""
    (w1, b1, w2, b2, w0a, w0b, b0, wf, bf) = params
    out = x @ w1 + b1
    out_struc = x_struc @ w2 + b2
    merged = jnp.concatenate([out, out_struc], axis=1) @ jnp.concatenate(
        [w0a, w0b], axis=0) + b0
    logits = merged @ wf + bf
    return jax.nn.softmax(logits, axis=1)


def folded_reference(x, x_struc, folded, num_class):
    """Pure-JAX reference with the same fold / bf16 weights as the kernel."""
    wa, wb, b_fused, wf_pad, bf_pad = folded
    merged = (jnp.dot(x.astype(jnp.bfloat16), wa, preferred_element_type=jnp.float32)
              + jnp.dot(x_struc.astype(jnp.bfloat16), wb,
                        preferred_element_type=jnp.float32)
              + b_fused)
    logits = jnp.dot(merged.astype(jnp.bfloat16), wf_pad,
                     preferred_element_type=jnp.float32) + bf_pad
    return jax.nn.softmax(logits, axis=1)[:, :num_class]


if __name__ == "__main__":
    # small-but-consistent shapes: dim*max_length = 512, struc_size = 64
    B, dim, max_length, struc_size, num_class = 8, 32, 16, 64, 10

    key = jax.random.PRNGKey(0)
    kx, ks, kp = jax.random.split(key, 3)
    x = jax.random.normal(kx, (B, dim * max_length), jnp.float32)
    x_struc = jax.random.normal(ks, (B, struc_size), jnp.float32)
    params = make_params(kp, dim, max_length, struc_size, num_class)
    folded = fold_params(params, num_class)

    out = text_linear_merge(x, x_struc, folded, num_class)
    out = jax.block_until_ready(out)
    assert out.shape == (B, num_class)

    # Tight check: same fold / bf16 weights / f32 accumulation, done in plain JAX.
    ref_bf16 = folded_reference(x, x_struc, folded, num_class)
    assert jnp.allclose(out, ref_bf16, atol=2e-3, rtol=2e-3)

    # Semantic check vs the f32 layer-by-layer reference (relaxed: bf16 weights).
    ref_f32 = reference_forward(x, x_struc, params)
    assert jnp.allclose(out, ref_f32, atol=2e-2)

    # Padded lanes are exactly 0 in softmax, so real classes still sum to 1.
    assert jnp.allclose(jnp.sum(out, axis=1), 1.0, atol=1e-4)

    print("KERNEL_OK")
</pallas_src>

<mosaic_0001>
module attributes {stable_mosaic.version = 11 : i64} {
  func.func @text_linear_merge_kernel(%arg0: memref<8x512xf32, #tpu.memory_space<vmem>>, %arg1: memref<8x64xf32, #tpu.memory_space<vmem>>, %arg2: memref<512x512xbf16, #tpu.memory_space<vmem>>, %arg3: memref<64x512xbf16, #tpu.memory_space<vmem>>, %arg4: memref<1x512xf32, #tpu.memory_space<vmem>>, %arg5: memref<512x128xbf16, #tpu.memory_space<vmem>>, %arg6: memref<1x128xf32, #tpu.memory_space<vmem>>, %arg7: memref<8x128xf32, #tpu.memory_space<vmem>>) attributes {dimension_semantics = [], scalar_prefetch = 0 : i64, scratch_operands = 0 : i64, tpu.core_type = #tpu.core_type<tc>} {
    %c0 = arith.constant 0 : index
    %c0_0 = arith.constant 0 : index
    %0 = vector.load %arg0[%c0, %c0_0] : memref<8x512xf32, #tpu.memory_space<vmem>>, vector<8x512xf32>
    %1 = arith.truncf %0 : vector<8x512xf32> to vector<8x512xbf16>
    %c0_1 = arith.constant 0 : index
    %c0_2 = arith.constant 0 : index
    %2 = vector.load %arg1[%c0_1, %c0_2] : memref<8x64xf32, #tpu.memory_space<vmem>>, vector<8x64xf32>
    %3 = arith.truncf %2 : vector<8x64xf32> to vector<8x64xbf16>
    %c0_3 = arith.constant 0 : index
    %c0_4 = arith.constant 0 : index
    %4 = vector.load %arg2[%c0_3, %c0_4] : memref<512x512xbf16, #tpu.memory_space<vmem>>, vector<512x512xbf16>
    %cst = arith.constant dense<0.000000e+00> : vector<8x512xf32>
    %5 = tpu.matmul %1, %4, %cst {dimension_numbers = #tpu.dot_dimension_numbers<[1], [0], [0], [1], [0, 0, 1, 1], [], []>} : vector<8x512xbf16>, vector<512x512xbf16>, vector<8x512xf32> -> vector<8x512xf32>
    %c0_5 = arith.constant 0 : index
    %c0_6 = arith.constant 0 : index
    %6 = vector.load %arg3[%c0_5, %c0_6] : memref<64x512xbf16, #tpu.memory_space<vmem>>, vector<64x512xbf16>
    %cst_7 = arith.constant dense<0.000000e+00> : vector<8x512xf32>
    %7 = tpu.matmul %3, %6, %cst_7 {dimension_numbers = #tpu.dot_dimension_numbers<[1], [0], [0], [1], [0, 0, 1, 1], [], []>} : vector<8x64xbf16>, vector<64x512xbf16>, vector<8x512xf32> -> vector<8x512xf32>
    %8 = arith.addf %5, %7 : vector<8x512xf32>
    %c0_8 = arith.constant 0 : index
    %c0_9 = arith.constant 0 : index
    %9 = vector.load %arg4[%c0_8, %c0_9] : memref<1x512xf32, #tpu.memory_space<vmem>>, vector<1x512xf32>
    %10 = vector.broadcast %9 : vector<1x512xf32> to vector<8x512xf32>
    %11 = arith.addf %8, %10 : vector<8x512xf32>
    %12 = arith.truncf %11 : vector<8x512xf32> to vector<8x512xbf16>
    %c0_10 = arith.constant 0 : index
    %c0_11 = arith.constant 0 : index
    %13 = vector.load %arg5[%c0_10, %c0_11] : memref<512x128xbf16, #tpu.memory_space<vmem>>, vector<512x128xbf16>
    %cst_12 = arith.constant dense<0.000000e+00> : vector<8x128xf32>
    %14 = tpu.matmul %12, %13, %cst_12 {dimension_numbers = #tpu.dot_dimension_numbers<[1], [0], [0], [1], [0, 0, 1, 1], [], []>} : vector<8x512xbf16>, vector<512x128xbf16>, vector<8x128xf32> -> vector<8x128xf32>
    %c0_13 = arith.constant 0 : index
    %c0_14 = arith.constant 0 : index
    %15 = vector.load %arg6[%c0_13, %c0_14] : memref<1x128xf32, #tpu.memory_space<vmem>>, vector<1x128xf32>
    %16 = vector.broadcast %15 : vector<1x128xf32> to vector<8x128xf32>
    %17 = arith.addf %14, %16 : vector<8x128xf32>
    %cst_15 = arith.constant dense<0xFF800000> : vector<8xf32>
    %18 = vector.multi_reduction <maximumf>, %17, %cst_15 [1] : vector<8x128xf32> to vector<8xf32>
    %19 = vector.shape_cast %18 : vector<8xf32> to vector<8x1xf32>
    %20 = vector.broadcast %19 : vector<8x1xf32> to vector<8x128xf32>
    %21 = arith.subf %17, %20 : vector<8x128xf32>
    %22 = math.exp %21 : vector<8x128xf32>
    %cst_16 = arith.constant dense<0.000000e+00> : vector<8xf32>
    %23 = vector.multi_reduction <add>, %22, %cst_16 [1] : vector<8x128xf32> to vector<8xf32>
    %24 = vector.shape_cast %23 : vector<8xf32> to vector<8x1xf32>
    %25 = tpu.reciprocal %24 : vector<8x1xf32> -> vector<8x1xf32>
    %26 = vector.broadcast %25 : vector<8x1xf32> to vector<8x128xf32>
    %27 = arith.mulf %22, %26 : vector<8x128xf32>
    %c0_17 = arith.constant 0 : index
    %c0_18 = arith.constant 0 : index
    %28 = vector.load %arg7[%c0_17, %c0_18] : memref<8x128xf32, #tpu.memory_space<vmem>>, vector<8x128xf32>
    tpu.vector_store %arg7[%c0_17, %c0_18], %27 {strides = array<i32>} : memref<8x128xf32, #tpu.memory_space<vmem>>, vector<8x128xf32>,
    return
  }
}

</mosaic_0001>

<llo_original>
// kernel: tpu_custom_call.1
$region0: #{tpu_custom_call.1}
  #allocation0 [shape = 'u32[]', space=smem, size = 0x4, offset = 0x4, fixed_abs, tag = 'smem constant byte address 0x4 - core index']
  #allocation1 [shape = 'u32[72,128]{1,0:T(1,128)}', space=vmem, size = 0x9000, scoped, tag = 'internal scratch']
  %s0 = inlined_call_operand.hbm [shape: f32[8,512], index: 0, kind: input, shape index: {}]
  %s1 = inlined_call_operand.hbm [shape: f32[8,64], index: 1, kind: input, shape index: {}]
  %s2 = inlined_call_operand.hbm [shape: bf16[512,512], index: 2, kind: input, shape index: {}]
  %s3 = inlined_call_operand.hbm [shape: bf16[64,512], index: 3, kind: input, shape index: {}]
  %s4 = inlined_call_operand.hbm [shape: f32[1,512], index: 4, kind: input, shape index: {}]
  %s5 = inlined_call_operand.hbm [shape: bf16[512,128], index: 5, kind: input, shape index: {}]
  %s6 = inlined_call_operand.vmem [shape: f32[1,128], index: 6, kind: input, shape index: {}]
  %s7 = inlined_call_operand.hbm [shape: f32[8,128], index: 7, kind: output, shape index: {}]
  %s8 = sld [smem:[#allocation0]]
  $region62: #{tpu_custom_call.1} parent=0
    _
  %s10 = ssub.s32 1, %s8
  %s11 = scalar_select 0, %s10, %s8
  $region1: #{tpu_custom_call.1} parent=0
    #allocation2 [shape = 'u8[16384]{0}', space=vmem, size = 0x4000, scoped, tag = 'input window, operand 0, single buffered']
    #allocation3 [shape = 's32[1]{0}', space=sflag, size = 0x4, scoped, tag = 'scoped memory for tpu_custom_call.1']
    #allocation4 [shape = 's32[1]{0}', space=sflag, size = 0x4, scoped, tag = 'scoped memory for tpu_custom_call.1']
    #allocation5 [shape = 'u8[4096]{0}', space=vmem, size = 0x1000, scoped, tag = 'input window, operand 1, single buffered']
    #allocation6 [shape = 's32[1]{0}', space=sflag, size = 0x4, scoped, tag = 'scoped memory for tpu_custom_call.1']
    #allocation7 [shape = 'u8[524288]{0}', space=vmem, size = 0x80000, scoped, tag = 'input window, operand 2, single buffered']
    #allocation8 [shape = 'u8[65536]{0}', space=vmem, size = 0x10000, scoped, tag = 'input window, operand 3, single buffered']
    #allocation9 [shape = 's32[1]{0}', space=sflag, size = 0x4, scoped, tag = 'scoped memory for tpu_custom_call.1']
    #allocation10 [shape = 'u8[2048]{0}', space=vmem, size = 0x800, scoped, tag = 'input window, operand 4, single buffered']
    #allocation11 [shape = 'u8[131072]{0}', space=vmem, size = 0x20000, scoped, tag = 'input window, operand 5, single buffered']
    #allocation12 [shape = 's32[1]{0}', space=sflag, size = 0x4, scoped, tag = 'scoped memory for tpu_custom_call.1']
    #allocation13 [shape = 'u8[4096]{0}', space=vmem, size = 0x1000, scoped, tag = 'output window, operand 0, single buffered']
    %12 = vsyncpa [#allocation3], 0
    %13 = vsyncpa [#allocation6], 0
    %14 = vsyncpa [#allocation9], 0
    %15 = vsyncpa [#allocation12], 0
    %16 = vsyncpa [#allocation4], 0
    // Predicated region
    $region2: #{tpu_custom_call.1} parent=1 // pred_check
      _
    $region3: #{tpu_custom_call.1} parent=1 // pred_check_branch
      %18 = sbr.rel (0) target = $region5
    $region4: #{tpu_custom_call.1} parent=1 // pred_region
      %20 = vsyncadd [#allocation3], 0
      %s22 = sshll.u32 %s0, 4
      %s23 = int_to_ptr.hbm [resolvable:$true] %s22
      %s24 = sshll.u32 [#allocation2], 4
      %s25 = int_to_ptr.vmem [resolvable:$true] %s24
      %27 = dma.hbm_to_vmem [thread:$0]  %s23, 512, %s25, [#allocation3]
    $region5: #{tpu_custom_call.1} parent=1 // pred_fallthru
      _
    // Predicated region
    $region6: #{tpu_custom_call.1} parent=1 // pred_check
      _
    $region7: #{tpu_custom_call.1} parent=1 // pred_check_branch
      %29 = sbr.rel (0) target = $region9
    $region8: #{tpu_custom_call.1} parent=1 // pred_region
      %31 = vsyncadd [#allocation6], 0
      %s33 = sshll.u32 %s1, 4
      %s34 = int_to_ptr.hbm [resolvable:$true] %s33
      %s35 = sshll.u32 [#allocation5], 4
      %s36 = int_to_ptr.vmem [resolvable:$true] %s35
      %38 = dma.hbm_to_vmem [thread:$0]  %s34, 128, %s36, [#allocation6]
    $region9: #{tpu_custom_call.1} parent=1 // pred_fallthru
      _
    // Predicated region
    $region10: #{tpu_custom_call.1} parent=1 // pred_check
      _
    $region11: #{tpu_custom_call.1} parent=1 // pred_check_branch
      %40 = sbr.rel (0) target = $region13
    $region12: #{tpu_custom_call.1} parent=1 // pred_region
      %42 = vsyncadd [#allocation6], 0
      %s43 = sshll.u32 %s2, 4
      %s44 = int_to_ptr.hbm [resolvable:$true] %s43
      %s45 = sshll.u32 [#allocation7], 4
      %s46 = int_to_ptr.vmem [resolvable:$true] %s45
      %51 = dma.hbm_to_vmem [thread:$0]  %s44, 16384, %s46, [#allocation6], 256, 256, 16
    $region13: #{tpu_custom_call.1} parent=1 // pred_fallthru
      _
    // Predicated region
    $region14: #{tpu_custom_call.1} parent=1 // pred_check
      _
    $region15: #{tpu_custom_call.1} parent=1 // pred_check_branch
      %53 = sbr.rel (0) target = $region17
    $region16: #{tpu_custom_call.1} parent=1 // pred_region
      %55 = vsyncadd [#allocation9], 0
      %s56 = sshll.u32 %s3, 4
      %s57 = int_to_ptr.hbm [resolvable:$true] %s56
      %s58 = sshll.u32 [#allocation8], 4
      %s59 = int_to_ptr.vmem [resolvable:$true] %s58
      %64 = dma.hbm_to_vmem [thread:$0]  %s57, 2048, %s59, [#allocation9], 256, 256, 16
    $region17: #{tpu_custom_call.1} parent=1 // pred_fallthru
      _
    // Predicated region
    $region18: #{tpu_custom_call.1} parent=1 // pred_check
      _
    $region19: #{tpu_custom_call.1} parent=1 // pred_check_branch
      %66 = sbr.rel (0) target = $region21
    $region20: #{tpu_custom_call.1} parent=1 // pred_region
      %68 = vsyncadd [#allocation9], 0
      %s70 = sshll.u32 %s4, 4
      %s71 = int_to_ptr.hbm [resolvable:$true] %s70
      %s72 = sshll.u32 [#allocation10], 4
      %s73 = int_to_ptr.vmem [resolvable:$true] %s72
      %75 = dma.hbm_to_vmem [thread:$0]  %s71, 64, %s73, [#allocation9]
    $region21: #{tpu_custom_call.1} parent=1 // pred_fallthru
      _
    // Predicated region
    $region22: #{tpu_custom_call.1} parent=1 // pred_check
      _
    $region23: #{tpu_custom_call.1} parent=1 // pred_check_branch
      %77 = sbr.rel (0) target = $region25
    $region24: #{tpu_custom_call.1} parent=1 // pred_region
      %79 = vsyncadd [#allocation12], 0
      %s80 = sshll.u32 %s5, 4
      %s81 = int_to_ptr.hbm [resolvable:$true] %s80
      %s82 = sshll.u32 [#allocation11], 4
      %s83 = int_to_ptr.vmem [resolvable:$true] %s82
      %88 = dma.hbm_to_vmem [thread:$0]  %s81, 4096, %s83, [#allocation12], 64, 64, 4
    $region25: #{tpu_custom_call.1} parent=1 // pred_fallthru
      _
    // Predicated region
    $region26: #{tpu_custom_call.1} parent=1 // pred_check
      _
    $region27: #{tpu_custom_call.1} parent=1 // pred_check_branch
      %90 = sbr.rel (0) target = $region29
    $region28: #{tpu_custom_call.1} parent=1 // pred_region
      _
    $region29: #{tpu_custom_call.1} parent=1 // pred_fallthru
      _
    // Predicated region
    $region30: #{tpu_custom_call.1} parent=1 // pred_check
      _
    $region31: #{tpu_custom_call.1} parent=1 // pred_check_branch
      %92 = sbr.rel (0) target = $region33
    $region32: #{tpu_custom_call.1} parent=1 // pred_region
      %94 = dma.done [#allocation3], 512
    $region33: #{tpu_custom_call.1} parent=1 // pred_fallthru
      _
    // Predicated region
    $region34: #{tpu_custom_call.1} parent=1 // pred_check
      _
    $region35: #{tpu_custom_call.1} parent=1 // pred_check_branch
      %96 = sbr.rel (0) target = $region37
    $region36: #{tpu_custom_call.1} parent=1 // pred_region
      %98 = dma.done [#allocation6], 128
    $region37: #{tpu_custom_call.1} parent=1 // pred_fallthru
      _
    // Predicated region
    $region38: #{tpu_custom_call.1} parent=1 // pred_check
      _
    $region39: #{tpu_custom_call.1} parent=1 // pred_check_branch
      %100 = sbr.rel (0) target = $region41
    $region40: #{tpu_custom_call.1} parent=1 // pred_region
      %102 = dma.done [#allocation6], 16384
    $region41: #{tpu_custom_call.1} parent=1 // pred_fallthru
      _
    // Predicated region
    $region42: #{tpu_custom_call.1} parent=1 // pred_check
      _
    $region43: #{tpu_custom_call.1} parent=1 // pred_check_branch
      %104 = sbr.rel (0) target = $region45
    $region44: #{tpu_custom_call.1} parent=1 // pred_region
      %106 = dma.done [#allocation9], 2048
    $region45: #{tpu_custom_call.1} parent=1 // pred_fallthru
      _
    // Predicated region
    $region46: #{tpu_custom_call.1} parent=1 // pred_check
      _
    $region47: #{tpu_custom_call.1} parent=1 // pred_check_branch
      %108 = sbr.rel (0) target = $region49
    $region48: #{tpu_custom_call.1} parent=1 // pred_region
      %110 = dma.done [#allocation9], 64
    $region49: #{tpu_custom_call.1} parent=1 // pred_fallthru
      _
    // Predicated region
    $region50: #{tpu_custom_call.1} parent=1 // pred_check
      _
    $region51: #{tpu_custom_call.1} parent=1 // pred_check_branch
      %112 = sbr.rel (0) target = $region53
    $region52: #{tpu_custom_call.1} parent=1 // pred_region
      %114 = dma.done [#allocation12], 4096
    $region53: #{tpu_custom_call.1} parent=1 // pred_fallthru
      _
    %v116 = vld [vmem:[#allocation2] sm:$0xff]
    %v117 = vld [vmem:[#allocation2 + $0x8] sm:$0xff]
    %v118 = vld [vmem:[#allocation2 + $0x10] sm:$0xff]
    %v119 = vld [vmem:[#allocation2 + $0x18] sm:$0xff]
    %v120 = vpack.c.bf16 %v116, %v116
    %v121 = vpack.c.bf16 %v117, %v117
    %v122 = vpack.c.bf16 %v118, %v118
    %v123 = vpack.c.bf16 %v119, %v119
    %v124 = vld [vmem:[#allocation5] sm:$0xff]
    %v125 = vpack.c.bf16 %v124, %v124
    %v126 = vld [vmem:[#allocation7] sm:$0xff]
    %v127 = vld [vmem:[#allocation7 + $0x8] sm:$0xff]
    %v128 = vld [vmem:[#allocation7 + $0x10] sm:$0xff]
    %v129 = vld [vmem:[#allocation7 + $0x18] sm:$0xff]
    %v130 = vld [vmem:[#allocation7 + $0x20] sm:$0xff]
    %v131 = vld [vmem:[#allocation7 + $0x28] sm:$0xff]
    %v132 = vld [vmem:[#allocation7 + $0x30] sm:$0xff]
    %v133 = vld [vmem:[#allocation7 + $0x38] sm:$0xff]
    %v134 = vld [vmem:[#allocation7 + $0x40] sm:$0xff]
    %v135 = vld [vmem:[#allocation7 + $0x48] sm:$0xff]
    %v136 = vld [vmem:[#allocation7 + $0x50] sm:$0xff]
    %v137 = vld [vmem:[#allocation7 + $0x58] sm:$0xff]
    %v138 = vld [vmem:[#allocation7 + $0x60] sm:$0xff]
    %v139 = vld [vmem:[#allocation7 + $0x68] sm:$0xff]
    %v140 = vld [vmem:[#allocation7 + $0x70] sm:$0xff]
    %v141 = vld [vmem:[#allocation7 + $0x78] sm:$0xff]
    %v142 = vld [vmem:[#allocation7 + $0x80] sm:$0xff]
    %v143 = vld [vmem:[#allocation7 + $0x88] sm:$0xff]
    %v144 = vld [vmem:[#allocation7 + $0x90] sm:$0xff]
    %v145 = vld [vmem:[#allocation7 + $0x98] sm:$0xff]
    %v146 = vld [vmem:[#allocation7 + $0xa0] sm:$0xff]
    %v147 = vld [vmem:[#allocation7 + $0xa8] sm:$0xff]
    %v148 = vld [vmem:[#allocation7 + $0xb0] sm:$0xff]
    %v149 = vld [vmem:[#allocation7 + $0xb8] sm:$0xff]
    %v150 = vld [vmem:[#allocation7 + $0xc0] sm:$0xff]
    %v151 = vld [vmem:[#allocation7 + $0xc8] sm:$0xff]
    %v152 = vld [vmem:[#allocation7 + $0xd0] sm:$0xff]
    %v153 = vld [vmem:[#allocation7 + $0xd8] sm:$0xff]
    %v154 = vld [vmem:[#allocation7 + $0xe0] sm:$0xff]
    %v155 = vld [vmem:[#allocation7 + $0xe8] sm:$0xff]
    %v156 = vld [vmem:[#allocation7 + $0xf0] sm:$0xff]
    %v157 = vld [vmem:[#allocation7 + $0xf8] sm:$0xff]
    %v158 = vld [vmem:[#allocation7 + $0x100] sm:$0xff]
    %v159 = vld [vmem:[#allocation7 + $0x108] sm:$0xff]
    %v160 = vld [vmem:[#allocation7 + $0x110] sm:$0xff]
    %v161 = vld [vmem:[#allocation7 + $0x118] sm:$0xff]
    %v162 = vld [vmem:[#allocation7 + $0x120] sm:$0xff]
    %v163 = vld [vmem:[#allocation7 + $0x128] sm:$0xff]
    %v164 = vld [vmem:[#allocation7 + $0x130] sm:$0xff]
    %v165 = vld [vmem:[#allocation7 + $0x138] sm:$0xff]
    %v166 = vld [vmem:[#allocation7 + $0x140] sm:$0xff]
    %v167 = vld [vmem:[#allocation7 + $0x148] sm:$0xff]
    %v168 = vld [vmem:[#allocation7 + $0x150] sm:$0xff]
    %v169 = vld [vmem:[#allocation7 + $0x158] sm:$0xff]
    %v170 = vld [vmem:[#allocation7 + $0x160] sm:$0xff]
    %v171 = vld [vmem:[#allocation7 + $0x168] sm:$0xff]
    %v172 = vld [vmem:[#allocation7 + $0x170] sm:$0xff]
    %v173 = vld [vmem:[#allocation7 + $0x178] sm:$0xff]
    %v174 = vld [vmem:[#allocation7 + $0x180] sm:$0xff]
    %v175 = vld [vmem:[#allocation7 + $0x188] sm:$0xff]
    %v176 = vld [vmem:[#allocation7 + $0x190] sm:$0xff]
    %v177 = vld [vmem:[#allocation7 + $0x198] sm:$0xff]
    %v178 = vld [vmem:[#allocation7 + $0x1a0] sm:$0xff]
    %v179 = vld [vmem:[#allocation7 + $0x1a8] sm:$0xff]
    %v180 = vld [vmem:[#allocation7 + $0x1b0] sm:$0xff]
    %v181 = vld [vmem:[#allocation7 + $0x1b8] sm:$0xff]
    %v182 = vld [vmem:[#allocation7 + $0x1c0] sm:$0xff]
    %v183 = vld [vmem:[#allocation7 + $0x1c8] sm:$0xff]
    %v184 = vld [vmem:[#allocation7 + $0x1d0] sm:$0xff]
    %v185 = vld [vmem:[#allocation7 + $0x1d8] sm:$0xff]
    %v186 = vld [vmem:[#allocation7 + $0x1e0] sm:$0xff]
    %v187 = vld [vmem:[#allocation7 + $0x1e8] sm:$0xff]
    %v188 = vld [vmem:[#allocation7 + $0x1f0] sm:$0xff]
    %v189 = vld [vmem:[#allocation7 + $0x1f8] sm:$0xff]
    %v190 = vld [vmem:[#allocation7 + $0x200] sm:$0xff]
    %v191 = vld [vmem:[#allocation7 + $0x208] sm:$0xff]
    %v192 = vld [vmem:[#allocation7 + $0x210] sm:$0xff]
    %v193 = vld [vmem:[#allocation7 + $0x218] sm:$0xff]
    %v194 = vld [vmem:[#allocation7 + $0x220] sm:$0xff]
    %v195 = vld [vmem:[#allocation7 + $0x228] sm:$0xff]
    %v196 = vld [vmem:[#allocation7 + $0x230] sm:$0xff]
    %v197 = vld [vmem:[#allocation7 + $0x238] sm:$0xff]
    %v198 = vld [vmem:[#allocation7 + $0x240] sm:$0xff]
    %v199 = vld [vmem:[#allocation7 + $0x248] sm:$0xff]
    %v200 = vld [vmem:[#allocation7 + $0x250] sm:$0xff]
    %v201 = vld [vmem:[#allocation7 + $0x258] sm:$0xff]
    %v202 = vld [vmem:[#allocation7 + $0x260] sm:$0xff]
    %v203 = vld [vmem:[#allocation7 + $0x268] sm:$0xff]
    %v204 = vld [vmem:[#allocation7 + $0x270] sm:$0xff]
    %v205 = vld [vmem:[#allocation7 + $0x278] sm:$0xff]
    %v206 = vld [vmem:[#allocation7 + $0x280] sm:$0xff]
    %v207 = vld [vmem:[#allocation7 + $0x288] sm:$0xff]
    %v208 = vld [vmem:[#allocation7 + $0x290] sm:$0xff]
    %v209 = vld [vmem:[#allocation7 + $0x298] sm:$0xff]
    %v210 = vld [vmem:[#allocation7 + $0x2a0] sm:$0xff]
    %v211 = vld [vmem:[#allocation7 + $0x2a8] sm:$0xff]
    %v212 = vld [vmem:[#allocation7 + $0x2b0] sm:$0xff]
    %v213 = vld [vmem:[#allocation7 + $0x2b8] sm:$0xff]
    %v214 = vld [vmem:[#allocation7 + $0x2c0] sm:$0xff]
    %v215 = vld [vmem:[#allocation7 + $0x2c8] sm:$0xff]
    %v216 = vld [vmem:[#allocation7 + $0x2d0] sm:$0xff]
    %v217 = vld [vmem:[#allocation7 + $0x2d8] sm:$0xff]
    %v218 = vld [vmem:[#allocation7 + $0x2e0] sm:$0xff]
    %v219 = vld [vmem:[#allocation7 + $0x2e8] sm:$0xff]
    %v220 = vld [vmem:[#allocation7 + $0x2f0] sm:$0xff]
    %v221 = vld [vmem:[#allocation7 + $0x2f8] sm:$0xff]
    %v222 = vld [vmem:[#allocation7 + $0x300] sm:$0xff]
    %v223 = vld [vmem:[#allocation7 + $0x308] sm:$0xff]
    %v224 = vld [vmem:[#allocation7 + $0x310] sm:$0xff]
    %v225 = vld [vmem:[#allocation7 + $0x318] sm:$0xff]
    %v226 = vld [vmem:[#allocation7 + $0x320] sm:$0xff]
    %v227 = vld [vmem:[#allocation7 + $0x328] sm:$0xff]
    %v228 = vld [vmem:[#allocation7 + $0x330] sm:$0xff]
    %v229 = vld [vmem:[#allocation7 + $0x338] sm:$0xff]
    %v230 = vld [vmem:[#allocation7 + $0x340] sm:$0xff]
    %v231 = vld [vmem:[#allocation7 + $0x348] sm:$0xff]
    %v232 = vld [vmem:[#allocation7 + $0x350] sm:$0xff]
    %v233 = vld [vmem:[#allocation7 + $0x358] sm:$0xff]
    %v234 = vld [vmem:[#allocation7 + $0x360] sm:$0xff]
    %v235 = vld [vmem:[#allocation7 + $0x368] sm:$0xff]
    %v236 = vld [vmem:[#allocation7 + $0x370] sm:$0xff]
    %v237 = vld [vmem:[#allocation7 + $0x378] sm:$0xff]
    %v238 = vld [vmem:[#allocation7 + $0x380] sm:$0xff]
    %v239 = vld [vmem:[#allocation7 + $0x388] sm:$0xff]
    %v240 = vld [vmem:[#allocation7 + $0x390] sm:$0xff]
    %v241 = vld [vmem:[#allocation7 + $0x398] sm:$0xff]
    %v242 = vld [vmem:[#allocation7 + $0x3a0] sm:$0xff]
    %v243 = vld [vmem:[#allocation7 + $0x3a8] sm:$0xff]
    %v244 = vld [vmem:[#allocation7 + $0x3b0] sm:$0xff]
    %v245 = vld [vmem:[#allocation7 + $0x3b8] sm:$0xff]
    %v246 = vld [vmem:[#allocation7 + $0x3c0] sm:$0xff]
    %v247 = vld [vmem:[#allocation7 + $0x3c8] sm:$0xff]
    %v248 = vld [vmem:[#allocation7 + $0x3d0] sm:$0xff]
    %v249 = vld [vmem:[#allocation7 + $0x3d8] sm:$0xff]
    %v250 = vld [vmem:[#allocation7 + $0x3e0] sm:$0xff]
    %v251 = vld [vmem:[#allocation7 + $0x3e8] sm:$0xff]
    %v252 = vld [vmem:[#allocation7 + $0x3f0] sm:$0xff]
    %v253 = vld [vmem:[#allocation7 + $0x3f8] sm:$0xff]
    %v254 = vld [vmem:[#allocation8] sm:$0xff]
    %v255 = vld [vmem:[#allocation8 + $0x8] sm:$0xff]
    %v256 = vld [vmem:[#allocation8 + $0x10] sm:$0xff]
    %v257 = vld [vmem:[#allocation8 + $0x18] sm:$0xff]
    %v258 = vld [vmem:[#allocation8 + $0x20] sm:$0xff]
    %v259 = vld [vmem:[#allocation8 + $0x28] sm:$0xff]
    %v260 = vld [vmem:[#allocation8 + $0x30] sm:$0xff]
    %v261 = vld [vmem:[#allocation8 + $0x38] sm:$0xff]
    %v262 = vld [vmem:[#allocation8 + $0x40] sm:$0xff]
    %v263 = vld [vmem:[#allocation8 + $0x48] sm:$0xff]
    %v264 = vld [vmem:[#allocation8 + $0x50] sm:$0xff]
    %v265 = vld [vmem:[#allocation8 + $0x58] sm:$0xff]
    %v266 = vld [vmem:[#allocation8 + $0x60] sm:$0xff]
    %v267 = vld [vmem:[#allocation8 + $0x68] sm:$0xff]
    %v268 = vld [vmem:[#allocation8 + $0x70] sm:$0xff]
    %v269 = vld [vmem:[#allocation8 + $0x78] sm:$0xff]
    %v286 = vunpack.c.l.b16 %v254
    %v287 = vunpack.c.h.b16 %v254
    %v288 = vunpack.c.l.b16 %v255
    %v289 = vunpack.c.h.b16 %v255
    %v290 = vunpack.c.l.b16 %v256
    %v291 = vunpack.c.h.b16 %v256
    %v292 = vunpack.c.l.b16 %v257
    %v293 = vunpack.c.h.b16 %v257
    %v294 = vunpack.c.l.b16 %v258
    %v295 = vunpack.c.h.b16 %v258
    %v296 = vunpack.c.l.b16 %v259
    %v297 = vunpack.c.h.b16 %v259
    %v298 = vunpack.c.l.b16 %v260
    %v299 = vunpack.c.h.b16 %v260
    %v300 = vunpack.c.l.b16 %v261
    %v301 = vunpack.c.h.b16 %v261
    %v302 = vunpack.c.l.b16 %v262
    %v303 = vunpack.c.h.b16 %v262
    %v304 = vunpack.c.l.b16 %v263
    %v305 = vunpack.c.h.b16 %v263
    %v306 = vunpack.c.l.b16 %v264
    %v307 = vunpack.c.h.b16 %v264
    %v308 = vunpack.c.l.b16 %v265
    %v309 = vunpack.c.h.b16 %v265
    %v310 = vunpack.c.l.b16 %v266
    %v311 = vunpack.c.h.b16 %v266
    %v312 = vunpack.c.l.b16 %v267
    %v313 = vunpack.c.h.b16 %v267
    %v314 = vunpack.c.l.b16 %v268
    %v315 = vunpack.c.h.b16 %v268
    %v316 = vunpack.c.l.b16 %v269
    %v317 = vunpack.c.h.b16 %v269
    %v318 = vpack.c.b16 %v290, %v286
    %v319 = vpack.c.b16 %v291, %v287
    %v320 = vpack.c.b16 %v292, %v288
    %v321 = vpack.c.b16 %v293, %v289
    %v322 = vpack.c.b16 %v298, %v294
    %v323 = vpack.c.b16 %v299, %v295
    %v324 = vpack.c.b16 %v300, %v296
    %v325 = vpack.c.b16 %v301, %v297
    %v326 = vpack.c.b16 %v306, %v302
    %v327 = vpack.c.b16 %v307, %v303
    %v328 = vpack.c.b16 %v308, %v304
    %v329 = vpack.c.b16 %v309, %v305
    %v330 = vpack.c.b16 %v314, %v310
    %v331 = vpack.c.b16 %v315, %v311
    %v332 = vpack.c.b16 %v316, %v312
    %v333 = vpack.c.b16 %v317, %v313
    %vm350 = vcmask 523264
    %v352 = vsel %vm350, %v125, 0
    %354 = vmatpush.bf16.msra.mxu0 0
    %355 = vmatpush.bf16.msra.mxu0 0
    %356 = vmatpush.bf16.msra.mxu0 0
    %357 = vmatpush.bf16.msra.mxu0 0
    %358 = vmatpush.bf16.msra.mxu0 %v330
    %359 = vmatpush.bf16.msra.mxu0 %v326
    %360 = vmatpush.bf16.msra.mxu0 %v322
    %361 = vmatpush.bf16.msra.mxu0 %v318
    %362 = vmatmul.bf16.gmra.mxu0 %v352
    %v363 = vpop.f32.mrf.mxu0
    %v364 = vadd.f32 0.0, %v363
    %v365 = vpop.f32.mrf.mxu0
    %366 = vdwg.mxu0
    %367 = vmatpush.bf16.msra.mxu0 0
    %368 = vmatpush.bf16.msra.mxu0 0
    %369 = vmatpush.bf16.msra.mxu0 0
    %370 = vmatpush.bf16.msra.mxu0 0
    %371 = vmatpush.bf16.msra.mxu0 %v331
    %372 = vmatpush.bf16.msra.mxu0 %v327
    %373 = vmatpush.bf16.msra.mxu0 %v323
    %374 = vmatpush.bf16.msra.mxu0 %v319
    %375 = vmatmul.bf16.gmra.mxu0 %v352
    %v376 = vpop.f32.mrf.mxu0
    %v377 = vadd.f32 0.0, %v376
    %v378 = vpop.f32.mrf.mxu0
    %379 = vdwg.mxu0
    %380 = vmatpush.bf16.msra.mxu0 0
    %381 = vmatpush.bf16.msra.mxu0 0
    %382 = vmatpush.bf16.msra.mxu0 0
    %383 = vmatpush.bf16.msra.mxu0 0
    %384 = vmatpush.bf16.msra.mxu0 %v332
    %385 = vmatpush.bf16.msra.mxu0 %v328
    %386 = vmatpush.bf16.msra.mxu0 %v324
    %387 = vmatpush.bf16.msra.mxu0 %v320
    %388 = vmatmul.bf16.gmra.mxu0 %v352
    %v389 = vpop.f32.mrf.mxu0
    %v390 = vadd.f32 0.0, %v389
    %v391 = vpop.f32.mrf.mxu0
    %392 = vdwg.mxu0
    %393 = vmatpush.bf16.msra.mxu0 0
    %394 = vmatpush.bf16.msra.mxu0 0
    %395 = vmatpush.bf16.msra.mxu0 0
    %396 = vmatpush.bf16.msra.mxu0 0
    %397 = vmatpush.bf16.msra.mxu0 %v333
    %398 = vmatpush.bf16.msra.mxu0 %v329
    %399 = vmatpush.bf16.msra.mxu0 %v325
    %400 = vmatpush.bf16.msra.mxu0 %v321
    %401 = vmatmul.bf16.gmra.mxu0 %v352
    %v402 = vpop.f32.mrf.mxu0
    %v403 = vadd.f32 0.0, %v402
    %v404 = vpop.f32.mrf.mxu0
    %405 = vdwg.mxu0
    %v534 = vunpack.c.l.b16 %v126
    %v535 = vunpack.c.h.b16 %v126
    %v536 = vunpack.c.l.b16 %v127
    %v537 = vunpack.c.h.b16 %v127
    %v538 = vunpack.c.l.b16 %v128
    %v539 = vunpack.c.h.b16 %v128
    %v540 = vunpack.c.l.b16 %v129
    %v541 = vunpack.c.h.b16 %v129
    %v542 = vunpack.c.l.b16 %v130
    %v543 = vunpack.c.h.b16 %v130
    %v544 = vunpack.c.l.b16 %v131
    %v545 = vunpack.c.h.b16 %v131
    %v546 = vunpack.c.l.b16 %v132
    %v547 = vunpack.c.h.b16 %v132
    %v548 = vunpack.c.l.b16 %v133
    %v549 = vunpack.c.h.b16 %v133
    %v550 = vunpack.c.l.b16 %v134
    %v551 = vunpack.c.h.b16 %v134
    %v552 = vunpack.c.l.b16 %v135
    %v553 = vunpack.c.h.b16 %v135
    %v554 = vunpack.c.l.b16 %v136
    %v555 = vunpack.c.h.b16 %v136
    %v556 = vunpack.c.l.b16 %v137
    %v557 = vunpack.c.h.b16 %v137
    %v558 = vunpack.c.l.b16 %v138
    %v559 = vunpack.c.h.b16 %v138
    %v560 = vunpack.c.l.b16 %v139
    %v561 = vunpack.c.h.b16 %v139
    %v562 = vunpack.c.l.b16 %v140
    %v563 = vunpack.c.h.b16 %v140
    %v564 = vunpack.c.l.b16 %v141
    %v565 = vunpack.c.h.b16 %v141
    %v566 = vunpack.c.l.b16 %v142
    %v567 = vunpack.c.h.b16 %v142
    %v568 = vunpack.c.l.b16 %v143
    %v569 = vunpack.c.h.b16 %v143
    %v570 = vunpack.c.l.b16 %v144
    %v571 = vunpack.c.h.b16 %v144
    %v572 = vunpack.c.l.b16 %v145
    %v573 = vunpack.c.h.b16 %v145
    %v574 = vunpack.c.l.b16 %v146
    %v575 = vunpack.c.h.b16 %v146
    %v576 = vunpack.c.l.b16 %v147
    %v577 = vunpack.c.h.b16 %v147
    %v578 = vunpack.c.l.b16 %v148
    %v579 = vunpack.c.h.b16 %v148
    %v580 = vunpack.c.l.b16 %v149
    %v581 = vunpack.c.h.b16 %v149
    %v582 = vunpack.c.l.b16 %v150
    %v583 = vunpack.c.h.b16 %v150
    %v584 = vunpack.c.l.b16 %v151
    %v585 = vunpack.c.h.b16 %v151
    %v586 = vunpack.c.l.b16 %v152
    %v587 = vunpack.c.h.b16 %v152
    %v588 = vunpack.c.l.b16 %v153
    %v589 = vunpack.c.h.b16 %v153
    %v590 = vunpack.c.l.b16 %v154
    %v591 = vunpack.c.h.b16 %v154
    %v592 = vunpack.c.l.b16 %v155
    %v593 = vunpack.c.h.b16 %v155
    %v594 = vunpack.c.l.b16 %v156
    %v595 = vunpack.c.h.b16 %v156
    %v596 = vunpack.c.l.b16 %v157
    %v597 = vunpack.c.h.b16 %v157
    %v598 = vunpack.c.l.b16 %v158
    %v599 = vunpack.c.h.b16 %v158
    %v600 = vunpack.c.l.b16 %v159
    %v601 = vunpack.c.h.b16 %v159
    %v602 = vunpack.c.l.b16 %v160
    %v603 = vunpack.c.h.b16 %v160
    %v604 = vunpack.c.l.b16 %v161
    %v605 = vunpack.c.h.b16 %v161
    %v606 = vunpack.c.l.b16 %v162
    %v607 = vunpack.c.h.b16 %v162
    %v608 = vunpack.c.l.b16 %v163
    %v609 = vunpack.c.h.b16 %v163
    %v610 = vunpack.c.l.b16 %v164
    %v611 = vunpack.c.h.b16 %v164
    %v612 = vunpack.c.l.b16 %v165
    %v613 = vunpack.c.h.b16 %v165
    %v614 = vunpack.c.l.b16 %v166
    %v615 = vunpack.c.h.b16 %v166
    %v616 = vunpack.c.l.b16 %v167
    %v617 = vunpack.c.h.b16 %v167
    %v618 = vunpack.c.l.b16 %v168
    %v619 = vunpack.c.h.b16 %v168
    %v620 = vunpack.c.l.b16 %v169
    %v621 = vunpack.c.h.b16 %v169
    %v622 = vunpack.c.l.b16 %v170
    %v623 = vunpack.c.h.b16 %v170
    %v624 = vunpack.c.l.b16 %v171
    %v625 = vunpack.c.h.b16 %v171
    %v626 = vunpack.c.l.b16 %v172
    %v627 = vunpack.c.h.b16 %v172
    %v628 = vunpack.c.l.b16 %v173
    %v629 = vunpack.c.h.b16 %v173
    %v630 = vunpack.c.l.b16 %v174
    %v631 = vunpack.c.h.b16 %v174
    %v632 = vunpack.c.l.b16 %v175
    %v633 = vunpack.c.h.b16 %v175
    %v634 = vunpack.c.l.b16 %v176
    %v635 = vunpack.c.h.b16 %v176
    %v636 = vunpack.c.l.b16 %v177
    %v637 = vunpack.c.h.b16 %v177
    %v638 = vunpack.c.l.b16 %v178
    %v639 = vunpack.c.h.b16 %v178
    %v640 = vunpack.c.l.b16 %v179
    %v641 = vunpack.c.h.b16 %v179
    %v642 = vunpack.c.l.b16 %v180
    %v643 = vunpack.c.h.b16 %v180
    %v644 = vunpack.c.l.b16 %v181
    %v645 = vunpack.c.h.b16 %v181
    %v646 = vunpack.c.l.b16 %v182
    %v647 = vunpack.c.h.b16 %v182
    %v648 = vunpack.c.l.b16 %v183
    %v649 = vunpack.c.h.b16 %v183
    %v650 = vunpack.c.l.b16 %v184
    %v651 = vunpack.c.h.b16 %v184
    %v652 = vunpack.c.l.b16 %v185
    %v653 = vunpack.c.h.b16 %v185
    %v654 = vunpack.c.l.b16 %v186
    %v655 = vunpack.c.h.b16 %v186
    %v656 = vunpack.c.l.b16 %v187
    %v657 = vunpack.c.h.b16 %v187
    %v658 = vunpack.c.l.b16 %v188
    %v659 = vunpack.c.h.b16 %v188
    %v660 = vunpack.c.l.b16 %v189
    %v661 = vunpack.c.h.b16 %v189
    %v662 = vunpack.c.l.b16 %v190
    %v663 = vunpack.c.h.b16 %v190
    %v664 = vunpack.c.l.b16 %v191
    %v665 = vunpack.c.h.b16 %v191
    %v666 = vunpack.c.l.b16 %v192
    %v667 = vunpack.c.h.b16 %v192
    %v668 = vunpack.c.l.b16 %v193
    %v669 = vunpack.c.h.b16 %v193
    %v670 = vunpack.c.l.b16 %v194
    %v671 = vunpack.c.h.b16 %v194
    %v672 = vunpack.c.l.b16 %v195
    %v673 = vunpack.c.h.b16 %v195
    %v674 = vunpack.c.l.b16 %v196
    %v675 = vunpack.c.h.b16 %v196
    %v676 = vunpack.c.l.b16 %v197
    %v677 = vunpack.c.h.b16 %v197
    %v678 = vunpack.c.l.b16 %v198
    %v679 = vunpack.c.h.b16 %v198
    %v680 = vunpack.c.l.b16 %v199
    %v681 = vunpack.c.h.b16 %v199
    %v682 = vunpack.c.l.b16 %v200
    %v683 = vunpack.c.h.b16 %v200
    %v684 = vunpack.c.l.b16 %v201
    %v685 = vunpack.c.h.b16 %v201
    %v686 = vunpack.c.l.b16 %v202
    %v687 = vunpack.c.h.b16 %v202
    %v688 = vunpack.c.l.b16 %v203
    %v689 = vunpack.c.h.b16 %v203
    %v690 = vunpack.c.l.b16 %v204
    %v691 = vunpack.c.h.b16 %v204
    %v692 = vunpack.c.l.b16 %v205
    %v693 = vunpack.c.h.b16 %v205
    %v694 = vunpack.c.l.b16 %v206
    %v695 = vunpack.c.h.b16 %v206
    %v696 = vunpack.c.l.b16 %v207
    %v697 = vunpack.c.h.b16 %v207
    %v698 = vunpack.c.l.b16 %v208
    %v699 = vunpack.c.h.b16 %v208
    %v700 = vunpack.c.l.b16 %v209
    %v701 = vunpack.c.h.b16 %v209
    %v702 = vunpack.c.l.b16 %v210
    %v703 = vunpack.c.h.b16 %v210
    %v704 = vunpack.c.l.b16 %v211
    %v705 = vunpack.c.h.b16 %v211
    %v706 = vunpack.c.l.b16 %v212
    %v707 = vunpack.c.h.b16 %v212
    %v708 = vunpack.c.l.b16 %v213
    %v709 = vunpack.c.h.b16 %v213
    %v710 = vunpack.c.l.b16 %v214
    %v711 = vunpack.c.h.b16 %v214
    %v712 = vunpack.c.l.b16 %v215
    %v713 = vunpack.c.h.b16 %v215
    %v714 = vunpack.c.l.b16 %v216
    %v715 = vunpack.c.h.b16 %v216
    %v716 = vunpack.c.l.b16 %v217
    %v717 = vunpack.c.h.b16 %v217
    %v718 = vunpack.c.l.b16 %v218
    %v719 = vunpack.c.h.b16 %v218
    %v720 = vunpack.c.l.b16 %v219
    %v721 = vunpack.c.h.b16 %v219
    %v722 = vunpack.c.l.b16 %v220
    %v723 = vunpack.c.h.b16 %v220
    %v724 = vunpack.c.l.b16 %v221
    %v725 = vunpack.c.h.b16 %v221
    %v726 = vunpack.c.l.b16 %v222
    %v727 = vunpack.c.h.b16 %v222
    %v728 = vunpack.c.l.b16 %v223
    %v729 = vunpack.c.h.b16 %v223
    %v730 = vunpack.c.l.b16 %v224
    %v731 = vunpack.c.h.b16 %v224
    %v732 = vunpack.c.l.b16 %v225
    %v733 = vunpack.c.h.b16 %v225
    %v734 = vunpack.c.l.b16 %v226
    %v735 = vunpack.c.h.b16 %v226
    %v736 = vunpack.c.l.b16 %v227
    %v737 = vunpack.c.h.b16 %v227
    %v738 = vunpack.c.l.b16 %v228
    %v739 = vunpack.c.h.b16 %v228
    %v740 = vunpack.c.l.b16 %v229
    %v741 = vunpack.c.h.b16 %v229
    %v742 = vunpack.c.l.b16 %v230
    %v743 = vunpack.c.h.b16 %v230
    %v744 = vunpack.c.l.b16 %v231
    %v745 = vunpack.c.h.b16 %v231
    %v746 = vunpack.c.l.b16 %v232
    %v747 = vunpack.c.h.b16 %v232
    %v748 = vunpack.c.l.b16 %v233
    %v749 = vunpack.c.h.b16 %v233
    %v750 = vunpack.c.l.b16 %v234
    %v751 = vunpack.c.h.b16 %v234
    %v752 = vunpack.c.l.b16 %v235
    %v753 = vunpack.c.h.b16 %v235
    %v754 = vunpack.c.l.b16 %v236
    %v755 = vunpack.c.h.b16 %v236
    %v756 = vunpack.c.l.b16 %v237
    %v757 = vunpack.c.h.b16 %v237
    %v758 = vunpack.c.l.b16 %v238
    %v759 = vunpack.c.h.b16 %v238
    %v760 = vunpack.c.l.b16 %v239
    %v761 = vunpack.c.h.b16 %v239
    %v762 = vunpack.c.l.b16 %v240
    %v763 = vunpack.c.h.b16 %v240
    %v764 = vunpack.c.l.b16 %v241
    %v765 = vunpack.c.h.b16 %v241
    %v766 = vunpack.c.l.b16 %v242
    %v767 = vunpack.c.h.b16 %v242
    %v768 = vunpack.c.l.b16 %v243
    %v769 = vunpack.c.h.b16 %v243
    %v770 = vunpack.c.l.b16 %v244
    %v771 = vunpack.c.h.b16 %v244
    %v772 = vunpack.c.l.b16 %v245
    %v773 = vunpack.c.h.b16 %v245
    %v774 = vunpack.c.l.b16 %v246
    %v775 = vunpack.c.h.b16 %v246
    %v776 = vunpack.c.l.b16 %v247
    %v777 = vunpack.c.h.b16 %v247
    %v778 = vunpack.c.l.b16 %v248
    %v779 = vunpack.c.h.b16 %v248
    %v780 = vunpack.c.l.b16 %v249
    %v781 = vunpack.c.h.b16 %v249
    %v782 = vunpack.c.l.b16 %v250
    %v783 = vunpack.c.h.b16 %v250
    %v784 = vunpack.c.l.b16 %v251
    %v785 = vunpack.c.h.b16 %v251
    %v786 = vunpack.c.l.b16 %v252
    %v787 = vunpack.c.h.b16 %v252
    %v788 = vunpack.c.l.b16 %v253
    %v789 = vunpack.c.h.b16 %v253
    %v790 = vpack.c.b16 %v538, %v534
    %v791 = vpack.c.b16 %v539, %v535
    %v792 = vpack.c.b16 %v540, %v536
    %v793 = vpack.c.b16 %v541, %v537
    %v794 = vpack.c.b16 %v546, %v542
    %v795 = vpack.c.b16 %v547, %v543
    %v796 = vpack.c.b16 %v548, %v544
    %v797 = vpack.c.b16 %v549, %v545
    %v798 = vpack.c.b16 %v554, %v550
    %v799 = vpack.c.b16 %v555, %v551
    %v800 = vpack.c.b16 %v556, %v552
    %v801 = vpack.c.b16 %v557, %v553
    %v802 = vpack.c.b16 %v562, %v558
    %v803 = vpack.c.b16 %v563, %v559
    %v804 = vpack.c.b16 %v564, %v560
    %v805 = vpack.c.b16 %v565, %v561
    %v806 = vpack.c.b16 %v570, %v566
    %v807 = vpack.c.b16 %v571, %v567
    %v808 = vpack.c.b16 %v572, %v568
    %v809 = vpack.c.b16 %v573, %v569
    %v810 = vpack.c.b16 %v578, %v574
    %v811 = vpack.c.b16 %v579, %v575
    %v812 = vpack.c.b16 %v580, %v576
    %v813 = vpack.c.b16 %v581, %v577
    %v814 = vpack.c.b16 %v586, %v582
    %v815 = vpack.c.b16 %v587, %v583
    %v816 = vpack.c.b16 %v588, %v584
    %v817 = vpack.c.b16 %v589, %v585
    %v818 = vpack.c.b16 %v594, %v590
    %v819 = vpack.c.b16 %v595, %v591
    %v820 = vpack.c.b16 %v596, %v592
    %v821 = vpack.c.b16 %v597, %v593
    %v822 = vpack.c.b16 %v602, %v598
    %v823 = vpack.c.b16 %v603, %v599
    %v824 = vpack.c.b16 %v604, %v600
    %v825 = vpack.c.b16 %v605, %v601
    %v826 = vpack.c.b16 %v610, %v606
    %v827 = vpack.c.b16 %v611, %v607
    %v828 = vpack.c.b16 %v612, %v608
    %v829 = vpack.c.b16 %v613, %v609
    %v830 = vpack.c.b16 %v618, %v614
    %v831 = vpack.c.b16 %v619, %v615
    %v832 = vpack.c.b16 %v620, %v616
    %v833 = vpack.c.b16 %v621, %v617
    %v834 = vpack.c.b16 %v626, %v622
    %v835 = vpack.c.b16 %v627, %v623
    %v836 = vpack.c.b16 %v628, %v624
    %v837 = vpack.c.b16 %v629, %v625
    %v838 = vpack.c.b16 %v634, %v630
    %v839 = vpack.c.b16 %v635, %v631
    %v840 = vpack.c.b16 %v636, %v632
    %v841 = vpack.c.b16 %v637, %v633
    %v842 = vpack.c.b16 %v642, %v638
    %v843 = vpack.c.b16 %v643, %v639
    %v844 = vpack.c.b16 %v644, %v640
    %v845 = vpack.c.b16 %v645, %v641
    %v846 = vpack.c.b16 %v650, %v646
    %v847 = vpack.c.b16 %v651, %v647
    %v848 = vpack.c.b16 %v652, %v648
    %v849 = vpack.c.b16 %v653, %v649
    %v850 = vpack.c.b16 %v658, %v654
    %v851 = vpack.c.b16 %v659, %v655
    %v852 = vpack.c.b16 %v660, %v656
    %v853 = vpack.c.b16 %v661, %v657
    %v854 = vpack.c.b16 %v666, %v662
    %v855 = vpack.c.b16 %v667, %v663
    %v856 = vpack.c.b16 %v668, %v664
    %v857 = vpack.c.b16 %v669, %v665
    %v858 = vpack.c.b16 %v674, %v670
    %v859 = vpack.c.b16 %v675, %v671
    %v860 = vpack.c.b16 %v676, %v672
    %v861 = vpack.c.b16 %v677, %v673
    %v862 = vpack.c.b16 %v682, %v678
    %v863 = vpack.c.b16 %v683, %v679
    %v864 = vpack.c.b16 %v684, %v680
    %v865 = vpack.c.b16 %v685, %v681
    %v866 = vpack.c.b16 %v690, %v686
    %v867 = vpack.c.b16 %v691, %v687
    %v868 = vpack.c.b16 %v692, %v688
    %v869 = vpack.c.b16 %v693, %v689
    %v870 = vpack.c.b16 %v698, %v694
    %v871 = vpack.c.b16 %v699, %v695
    %v872 = vpack.c.b16 %v700, %v696
    %v873 = vpack.c.b16 %v701, %v697
    %v874 = vpack.c.b16 %v706, %v702
    %v875 = vpack.c.b16 %v707, %v703
    %v876 = vpack.c.b16 %v708, %v704
    %v877 = vpack.c.b16 %v709, %v705
    %v878 = vpack.c.b16 %v714, %v710
    %v879 = vpack.c.b16 %v715, %v711
    %v880 = vpack.c.b16 %v716, %v712
    %v881 = vpack.c.b16 %v717, %v713
    %v882 = vpack.c.b16 %v722, %v718
    %v883 = vpack.c.b16 %v723, %v719
    %v884 = vpack.c.b16 %v724, %v720
    %v885 = vpack.c.b16 %v725, %v721
    %v886 = vpack.c.b16 %v730, %v726
    %v887 = vpack.c.b16 %v731, %v727
    %v888 = vpack.c.b16 %v732, %v728
    %v889 = vpack.c.b16 %v733, %v729
    %v890 = vpack.c.b16 %v738, %v734
    %v891 = vpack.c.b16 %v739, %v735
    %v892 = vpack.c.b16 %v740, %v736
    %v893 = vpack.c.b16 %v741, %v737
    %v894 = vpack.c.b16 %v746, %v742
    %v895 = vpack.c.b16 %v747, %v743
    %v896 = vpack.c.b16 %v748, %v744
    %v897 = vpack.c.b16 %v749, %v745
    %v898 = vpack.c.b16 %v754, %v750
    %v899 = vpack.c.b16 %v755, %v751
    %v900 = vpack.c.b16 %v756, %v752
    %v901 = vpack.c.b16 %v757, %v753
    %v902 = vpack.c.b16 %v762, %v758
    %v903 = vpack.c.b16 %v763, %v759
    %v904 = vpack.c.b16 %v764, %v760
    %v905 = vpack.c.b16 %v765, %v761
    %v906 = vpack.c.b16 %v770, %v766
    %v907 = vpack.c.b16 %v771, %v767
    %v908 = vpack.c.b16 %v772, %v768
    %v909 = vpack.c.b16 %v773, %v769
    %v910 = vpack.c.b16 %v778, %v774
    %v911 = vpack.c.b16 %v779, %v775
    %v912 = vpack.c.b16 %v780, %v776
    %v913 = vpack.c.b16 %v781, %v777
    %v914 = vpack.c.b16 %v786, %v782
    %v915 = vpack.c.b16 %v787, %v783
    %v916 = vpack.c.b16 %v788, %v784
    %v917 = vpack.c.b16 %v789, %v785
    %1046 = vmatpush.bf16.msra.mxu0 %v818
    %1047 = vmatpush.bf16.msra.mxu0 %v814
    %1048 = vmatpush.bf16.msra.mxu0 %v810
    %1049 = vmatpush.bf16.msra.mxu0 %v806
    %1050 = vmatpush.bf16.msra.mxu0 %v802
    %1051 = vmatpush.bf16.msra.mxu0 %v798
    %1052 = vmatpush.bf16.msra.mxu0 %v794
    %1053 = vmatpush.bf16.msra.mxu0 %v790
    %1054 = vmatmul.bf16.gmra.mxu0 %v120
    %v1055 = vpop.f32.mrf.mxu0
    %v1056 = vadd.f32 %v364, %v1055
    %v1057 = vpop.f32.mrf.mxu0
    %1058 = vdwg.mxu0
    %1059 = vmatpush.bf16.msra.mxu0 %v850
    %1060 = vmatpush.bf16.msra.mxu0 %v846
    %1061 = vmatpush.bf16.msra.mxu0 %v842
    %1062 = vmatpush.bf16.msra.mxu0 %v838
    %1063 = vmatpush.bf16.msra.mxu0 %v834
    %1064 = vmatpush.bf16.msra.mxu0 %v830
    %1065 = vmatpush.bf16.msra.mxu0 %v826
    %1066 = vmatpush.bf16.msra.mxu0 %v822
    %1067 = vmatmul.bf16.gmra.mxu0 %v121
    %v1068 = vpop.f32.mrf.mxu0
    %v1069 = vadd.f32 %v1056, %v1068
    %v1070 = vpop.f32.mrf.mxu0
    %1071 = vdwg.mxu0
    %1072 = vmatpush.bf16.msra.mxu0 %v882
    %1073 = vmatpush.bf16.msra.mxu0 %v878
    %1074 = vmatpush.bf16.msra.mxu0 %v874
    %1075 = vmatpush.bf16.msra.mxu0 %v870
    %1076 = vmatpush.bf16.msra.mxu0 %v866
    %1077 = vmatpush.bf16.msra.mxu0 %v862
    %1078 = vmatpush.bf16.msra.mxu0 %v858
    %1079 = vmatpush.bf16.msra.mxu0 %v854
    %1080 = vmatmul.bf16.gmra.mxu0 %v122
    %v1081 = vpop.f32.mrf.mxu0
    %v1082 = vadd.f32 %v1069, %v1081
    %v1083 = vpop.f32.mrf.mxu0
    %1084 = vdwg.mxu0
    %1085 = vmatpush.bf16.msra.mxu0 %v914
    %1086 = vmatpush.bf16.msra.mxu0 %v910
    %1087 = vmatpush.bf16.msra.mxu0 %v906
    %1088 = vmatpush.bf16.msra.mxu0 %v902
    %1089 = vmatpush.bf16.msra.mxu0 %v898
    %1090 = vmatpush.bf16.msra.mxu0 %v894
    %1091 = vmatpush.bf16.msra.mxu0 %v890
    %1092 = vmatpush.bf16.msra.mxu0 %v886
    %1093 = vmatmul.bf16.gmra.mxu0 %v123
    %v1094 = vpop.f32.mrf.mxu0
    %v1095 = vadd.f32 %v1082, %v1094
    %v1096 = vpop.f32.mrf.mxu0
    %1097 = vdwg.mxu0
    %1098 = vmatpush.bf16.msra.mxu0 %v819
    %1099 = vmatpush.bf16.msra.mxu0 %v815
    %1100 = vmatpush.bf16.msra.mxu0 %v811
    %1101 = vmatpush.bf16.msra.mxu0 %v807
    %1102 = vmatpush.bf16.msra.mxu0 %v803
    %1103 = vmatpush.bf16.msra.mxu0 %v799
    %1104 = vmatpush.bf16.msra.mxu0 %v795
    %1105 = vmatpush.bf16.msra.mxu0 %v791
    %1106 = vmatmul.bf16.gmra.mxu0 %v120
    %v1107 = vpop.f32.mrf.mxu0
    %v1108 = vadd.f32 %v377, %v1107
    %v1109 = vpop.f32.mrf.mxu0
    %1110 = vdwg.mxu0
    %1111 = vmatpush.bf16.msra.mxu0 %v851
    %1112 = vmatpush.bf16.msra.mxu0 %v847
    %1113 = vmatpush.bf16.msra.mxu0 %v843
    %1114 = vmatpush.bf16.msra.mxu0 %v839
    %1115 = vmatpush.bf16.msra.mxu0 %v835
    %1116 = vmatpush.bf16.msra.mxu0 %v831
    %1117 = vmatpush.bf16.msra.mxu0 %v827
    %1118 = vmatpush.bf16.msra.mxu0 %v823
    %1119 = vmatmul.bf16.gmra.mxu0 %v121
    %v1120 = vpop.f32.mrf.mxu0
    %v1121 = vadd.f32 %v1108, %v1120
    %v1122 = vpop.f32.mrf.mxu0
    %1123 = vdwg.mxu0
    %1124 = vmatpush.bf16.msra.mxu0 %v883
    %1125 = vmatpush.bf16.msra.mxu0 %v879
    %1126 = vmatpush.bf16.msra.mxu0 %v875
    %1127 = vmatpush.bf16.msra.mxu0 %v871
    %1128 = vmatpush.bf16.msra.mxu0 %v867
    %1129 = vmatpush.bf16.msra.mxu0 %v863
    %1130 = vmatpush.bf16.msra.mxu0 %v859
    %1131 = vmatpush.bf16.msra.mxu0 %v855
    %1132 = vmatmul.bf16.gmra.mxu0 %v122
    %v1133 = vpop.f32.mrf.mxu0
    %v1134 = vadd.f32 %v1121, %v1133
    %v1135 = vpop.f32.mrf.mxu0
    %1136 = vdwg.mxu0
    %1137 = vmatpush.bf16.msra.mxu0 %v915
    %1138 = vmatpush.bf16.msra.mxu0 %v911
    %1139 = vmatpush.bf16.msra.mxu0 %v907
    %1140 = vmatpush.bf16.msra.mxu0 %v903
    %1141 = vmatpush.bf16.msra.mxu0 %v899
    %1142 = vmatpush.bf16.msra.mxu0 %v895
    %1143 = vmatpush.bf16.msra.mxu0 %v891
    %1144 = vmatpush.bf16.msra.mxu0 %v887
    %1145 = vmatmul.bf16.gmra.mxu0 %v123
    %v1146 = vpop.f32.mrf.mxu0
    %v1147 = vadd.f32 %v1134, %v1146
    %v1148 = vpop.f32.mrf.mxu0
    %1149 = vdwg.mxu0
    %1150 = vmatpush.bf16.msra.mxu0 %v820
    %1151 = vmatpush.bf16.msra.mxu0 %v816
    %1152 = vmatpush.bf16.msra.mxu0 %v812
    %1153 = vmatpush.bf16.msra.mxu0 %v808
    %1154 = vmatpush.bf16.msra.mxu0 %v804
    %1155 = vmatpush.bf16.msra.mxu0 %v800
    %1156 = vmatpush.bf16.msra.mxu0 %v796
    %1157 = vmatpush.bf16.msra.mxu0 %v792
    %1158 = vmatmul.bf16.gmra.mxu0 %v120
    %v1159 = vpop.f32.mrf.mxu0
    %v1160 = vadd.f32 %v390, %v1159
    %v1161 = vpop.f32.mrf.mxu0
    %1162 = vdwg.mxu0
    %1163 = vmatpush.bf16.msra.mxu0 %v852
    %1164 = vmatpush.bf16.msra.mxu0 %v848
    %1165 = vmatpush.bf16.msra.mxu0 %v844
    %1166 = vmatpush.bf16.msra.mxu0 %v840
    %1167 = vmatpush.bf16.msra.mxu0 %v836
    %1168 = vmatpush.bf16.msra.mxu0 %v832
    %1169 = vmatpush.bf16.msra.mxu0 %v828
    %1170 = vmatpush.bf16.msra.mxu0 %v824
    %1171 = vmatmul.bf16.gmra.mxu0 %v121
    %v1172 = vpop.f32.mrf.mxu0
    %v1173 = vadd.f32 %v1160, %v1172
    %v1174 = vpop.f32.mrf.mxu0
    %1175 = vdwg.mxu0
    %1176 = vmatpush.bf16.msra.mxu0 %v884
    %1177 = vmatpush.bf16.msra.mxu0 %v880
    %1178 = vmatpush.bf16.msra.mxu0 %v876
    %1179 = vmatpush.bf16.msra.mxu0 %v872
    %1180 = vmatpush.bf16.msra.mxu0 %v868
    %1181 = vmatpush.bf16.msra.mxu0 %v864
    %1182 = vmatpush.bf16.msra.mxu0 %v860
    %1183 = vmatpush.bf16.msra.mxu0 %v856
    %1184 = vmatmul.bf16.gmra.mxu0 %v122
    %v1185 = vpop.f32.mrf.mxu0
    %v1186 = vadd.f32 %v1173, %v1185
    %v1187 = vpop.f32.mrf.mxu0
    %1188 = vdwg.mxu0
    %1189 = vmatpush.bf16.msra.mxu0 %v916
    %1190 = vmatpush.bf16.msra.mxu0 %v912
    %1191 = vmatpush.bf16.msra.mxu0 %v908
    %1192 = vmatpush.bf16.msra.mxu0 %v904
    %1193 = vmatpush.bf16.msra.mxu0 %v900
    %1194 = vmatpush.bf16.msra.mxu0 %v896
    %1195 = vmatpush.bf16.msra.mxu0 %v892
    %1196 = vmatpush.bf16.msra.mxu0 %v888
    %1197 = vmatmul.bf16.gmra.mxu0 %v123
    %v1198 = vpop.f32.mrf.mxu0
    %v1199 = vadd.f32 %v1186, %v1198
    %v1200 = vpop.f32.mrf.mxu0
    %1201 = vdwg.mxu0
    %1202 = vmatpush.bf16.msra.mxu0 %v821
    %1203 = vmatpush.bf16.msra.mxu0 %v817
    %1204 = vmatpush.bf16.msra.mxu0 %v813
    %1205 = vmatpush.bf16.msra.mxu0 %v809
    %1206 = vmatpush.bf16.msra.mxu0 %v805
    %1207 = vmatpush.bf16.msra.mxu0 %v801
    %1208 = vmatpush.bf16.msra.mxu0 %v797
    %1209 = vmatpush.bf16.msra.mxu0 %v793
    %1210 = vmatmul.bf16.gmra.mxu0 %v120
    %v1211 = vpop.f32.mrf.mxu0
    %v1212 = vadd.f32 %v403, %v1211
    %v1213 = vpop.f32.mrf.mxu0
    %1214 = vdwg.mxu0
    %1215 = vmatpush.bf16.msra.mxu0 %v853
    %1216 = vmatpush.bf16.msra.mxu0 %v849
    %1217 = vmatpush.bf16.msra.mxu0 %v845
    %1218 = vmatpush.bf16.msra.mxu0 %v841
    %1219 = vmatpush.bf16.msra.mxu0 %v837
    %1220 = vmatpush.bf16.msra.mxu0 %v833
    %1221 = vmatpush.bf16.msra.mxu0 %v829
    %1222 = vmatpush.bf16.msra.mxu0 %v825
    %1223 = vmatmul.bf16.gmra.mxu0 %v121
    %v1224 = vpop.f32.mrf.mxu0
    %v1225 = vadd.f32 %v1212, %v1224
    %v1226 = vpop.f32.mrf.mxu0
    %1227 = vdwg.mxu0
    %1228 = vmatpush.bf16.msra.mxu0 %v885
    %1229 = vmatpush.bf16.msra.mxu0 %v881
    %1230 = vmatpush.bf16.msra.mxu0 %v877
    %1231 = vmatpush.bf16.msra.mxu0 %v873
    %1232 = vmatpush.bf16.msra.mxu0 %v869
    %1233 = vmatpush.bf16.msra.mxu0 %v865
    %1234 = vmatpush.bf16.msra.mxu0 %v861
    %1235 = vmatpush.bf16.msra.mxu0 %v857
    %1236 = vmatmul.bf16.gmra.mxu0 %v122
    %v1237 = vpop.f32.mrf.mxu0
    %v1238 = vadd.f32 %v1225, %v1237
    %v1239 = vpop.f32.mrf.mxu0
    %1240 = vdwg.mxu0
    %1241 = vmatpush.bf16.msra.mxu0 %v917
    %1242 = vmatpush.bf16.msra.mxu0 %v913
    %1243 = vmatpush.bf16.msra.mxu0 %v909
    %1244 = vmatpush.bf16.msra.mxu0 %v905
    %1245 = vmatpush.bf16.msra.mxu0 %v901
    %1246 = vmatpush.bf16.msra.mxu0 %v897
    %1247 = vmatpush.bf16.msra.mxu0 %v893
    %1248 = vmatpush.bf16.msra.mxu0 %v889
    %1249 = vmatmul.bf16.gmra.mxu0 %v123
    %v1250 = vpop.f32.mrf.mxu0
    %v1251 = vadd.f32 %v1238, %v1250
    %v1252 = vpop.f32.mrf.mxu0
    %1253 = vdwg.mxu0
    %v1254 = vld [vmem:[#allocation10] sm:$0xf]
    %v1256 = vperm.slane %v1254, 0
    %v1257 = vperm.slane %v1254, 1
    %v1258 = vperm.slane %v1254, 2
    %v1259 = vperm.slane %v1254, 3
    %v1264 = vadd.f32 %v1095, %v1256
    %v1265 = vadd.f32 %v1147, %v1257
    %v1266 = vadd.f32 %v1199, %v1258
    %v1267 = vadd.f32 %v1251, %v1259
    %v1268 = vpack.c.bf16 %v1264, %v1264
    %v1269 = vpack.c.bf16 %v1265, %v1265
    %v1270 = vpack.c.bf16 %v1266, %v1266
    %v1271 = vpack.c.bf16 %v1267, %v1267
    %v1272 = vld [vmem:[#allocation11] sm:$0xf]
    %v1273 = vld [vmem:[#allocation11 + $0x4] sm:$0xf]
    %v1274 = vld [vmem:[#allocation11 + $0x8] sm:$0xf]
    %v1275 = vld [vmem:[#allocation11 + $0xc] sm:$0xf]
    %v1276 = vld [vmem:[#allocation11 + $0x10] sm:$0xf]
    %v1277 = vld [vmem:[#allocation11 + $0x14] sm:$0xf]
    %v1278 = vld [vmem:[#allocation11 + $0x18] sm:$0xf]
    %v1279 = vld [vmem:[#allocation11 + $0x1c] sm:$0xf]
    %v1280 = vld [vmem:[#allocation11 + $0x20] sm:$0xf]
    %v1281 = vld [vmem:[#allocation11 + $0x24] sm:$0xf]
    %v1282 = vld [vmem:[#allocation11 + $0x28] sm:$0xf]
    %v1283 = vld [vmem:[#allocation11 + $0x2c] sm:$0xf]
    %v1284 = vld [vmem:[#allocation11 + $0x30] sm:$0xf]
    %v1285 = vld [vmem:[#allocation11 + $0x34] sm:$0xf]
    %v1286 = vld [vmem:[#allocation11 + $0x38] sm:$0xf]
    %v1287 = vld [vmem:[#allocation11 + $0x3c] sm:$0xf]
    %v1288 = vld [vmem:[#allocation11 + $0x40] sm:$0xf]
    %v1289 = vld [vmem:[#allocation11 + $0x44] sm:$0xf]
    %v1290 = vld [vmem:[#allocation11 + $0x48] sm:$0xf]
    %v1291 = vld [vmem:[#allocation11 + $0x4c] sm:$0xf]
    %v1292 = vld [vmem:[#allocation11 + $0x50] sm:$0xf]
    %v1293 = vld [vmem:[#allocation11 + $0x54] sm:$0xf]
    %v1294 = vld [vmem:[#allocation11 + $0x58] sm:$0xf]
    %v1295 = vld [vmem:[#allocation11 + $0x5c] sm:$0xf]
    %v1296 = vld [vmem:[#allocation11 + $0x60] sm:$0xf]
    %v1297 = vld [vmem:[#allocation11 + $0x64] sm:$0xf]
    %v1298 = vld [vmem:[#allocation11 + $0x68] sm:$0xf]
    %v1299 = vld [vmem:[#allocation11 + $0x6c] sm:$0xf]
    %v1300 = vld [vmem:[#allocation11 + $0x70] sm:$0xf]
    %v1301 = vld [vmem:[#allocation11 + $0x74] sm:$0xf]
    %v1302 = vld [vmem:[#allocation11 + $0x78] sm:$0xf]
    %v1303 = vld [vmem:[#allocation11 + $0x7c] sm:$0xf]
    %v1304 = vld [vmem:[#allocation11 + $0x80] sm:$0xf]
    %v1305 = vld [vmem:[#allocation11 + $0x84] sm:$0xf]
    %v1306 = vld [vmem:[#allocation11 + $0x88] sm:$0xf]
    %v1307 = vld [vmem:[#allocation11 + $0x8c] sm:$0xf]
    %v1308 = vld [vmem:[#allocation11 + $0x90] sm:$0xf]
    %v1309 = vld [vmem:[#allocation11 + $0x94] sm:$0xf]
    %v1310 = vld [vmem:[#allocation11 + $0x98] sm:$0xf]
    %v1311 = vld [vmem:[#allocation11 + $0x9c] sm:$0xf]
    %v1312 = vld [vmem:[#allocation11 + $0xa0] sm:$0xf]
    %v1313 = vld [vmem:[#allocation11 + $0xa4] sm:$0xf]
    %v1314 = vld [vmem:[#allocation11 + $0xa8] sm:$0xf]
    %v1315 = vld [vmem:[#allocation11 + $0xac] sm:$0xf]
    %v1316 = vld [vmem:[#allocation11 + $0xb0] sm:$0xf]
    %v1317 = vld [vmem:[#allocation11 + $0xb4] sm:$0xf]
    %v1318 = vld [vmem:[#allocation11 + $0xb8] sm:$0xf]
    %v1319 = vld [vmem:[#allocation11 + $0xbc] sm:$0xf]
    %v1320 = vld [vmem:[#allocation11 + $0xc0] sm:$0xf]
    %v1321 = vld [vmem:[#allocation11 + $0xc4] sm:$0xf]
    %v1322 = vld [vmem:[#allocation11 + $0xc8] sm:$0xf]
    %v1323 = vld [vmem:[#allocation11 + $0xcc] sm:$0xf]
    %v1324 = vld [vmem:[#allocation11 + $0xd0] sm:$0xf]
    %v1325 = vld [vmem:[#allocation11 + $0xd4] sm:$0xf]
    %v1326 = vld [vmem:[#allocation11 + $0xd8] sm:$0xf]
    %v1327 = vld [vmem:[#allocation11 + $0xdc] sm:$0xf]
    %v1328 = vld [vmem:[#allocation11 + $0xe0] sm:$0xf]
    %v1329 = vld [vmem:[#allocation11 + $0xe4] sm:$0xf]
    %v1330 = vld [vmem:[#allocation11 + $0xe8] sm:$0xf]
    %v1331 = vld [vmem:[#allocation11 + $0xec] sm:$0xf]
    %v1332 = vld [vmem:[#allocation11 + $0xf0] sm:$0xf]
    %v1333 = vld [vmem:[#allocation11 + $0xf4] sm:$0xf]
    %v1334 = vld [vmem:[#allocation11 + $0xf8] sm:$0xf]
    %v1335 = vld [vmem:[#allocation11 + $0xfc] sm:$0xf]
    %v1336 = vld [vmem:[%s6] sm:$0x1]
    %v1338 = vperm.slane %v1336, 0
    %v1404 = vunpack.c.l.b16 %v1272
    %v1405 = vunpack.c.l.b16 %v1273
    %v1406 = vunpack.c.l.b16 %v1274
    %v1407 = vunpack.c.l.b16 %v1275
    %v1408 = vunpack.c.l.b16 %v1276
    %v1409 = vunpack.c.l.b16 %v1277
    %v1410 = vunpack.c.l.b16 %v1278
    %v1411 = vunpack.c.l.b16 %v1279
    %v1412 = vunpack.c.l.b16 %v1280
    %v1413 = vunpack.c.l.b16 %v1281
    %v1414 = vunpack.c.l.b16 %v1282
    %v1415 = vunpack.c.l.b16 %v1283
    %v1416 = vunpack.c.l.b16 %v1284
    %v1417 = vunpack.c.l.b16 %v1285
    %v1418 = vunpack.c.l.b16 %v1286
    %v1419 = vunpack.c.l.b16 %v1287
    %v1420 = vunpack.c.l.b16 %v1288
    %v1421 = vunpack.c.l.b16 %v1289
    %v1422 = vunpack.c.l.b16 %v1290
    %v1423 = vunpack.c.l.b16 %v1291
    %v1424 = vunpack.c.l.b16 %v1292
    %v1425 = vunpack.c.l.b16 %v1293
    %v1426 = vunpack.c.l.b16 %v1294
    %v1427 = vunpack.c.l.b16 %v1295
    %v1428 = vunpack.c.l.b16 %v1296
    %v1429 = vunpack.c.l.b16 %v1297
    %v1430 = vunpack.c.l.b16 %v1298
    %v1431 = vunpack.c.l.b16 %v1299
    %v1432 = vunpack.c.l.b16 %v1300
    %v1433 = vunpack.c.l.b16 %v1301
    %v1434 = vunpack.c.l.b16 %v1302
    %v1435 = vunpack.c.l.b16 %v1303
    %v1436 = vunpack.c.l.b16 %v1304
    %v1437 = vunpack.c.l.b16 %v1305
    %v1438 = vunpack.c.l.b16 %v1306
    %v1439 = vunpack.c.l.b16 %v1307
    %v1440 = vunpack.c.l.b16 %v1308
    %v1441 = vunpack.c.l.b16 %v1309
    %v1442 = vunpack.c.l.b16 %v1310
    %v1443 = vunpack.c.l.b16 %v1311
    %v1444 = vunpack.c.l.b16 %v1312
    %v1445 = vunpack.c.l.b16 %v1313
    %v1446 = vunpack.c.l.b16 %v1314
    %v1447 = vunpack.c.l.b16 %v1315
    %v1448 = vunpack.c.l.b16 %v1316
    %v1449 = vunpack.c.l.b16 %v1317
    %v1450 = vunpack.c.l.b16 %v1318
    %v1451 = vunpack.c.l.b16 %v1319
    %v1452 = vunpack.c.l.b16 %v1320
    %v1453 = vunpack.c.l.b16 %v1321
    %v1454 = vunpack.c.l.b16 %v1322
    %v1455 = vunpack.c.l.b16 %v1323
    %v1456 = vunpack.c.l.b16 %v1324
    %v1457 = vunpack.c.l.b16 %v1325
    %v1458 = vunpack.c.l.b16 %v1326
    %v1459 = vunpack.c.l.b16 %v1327
    %v1460 = vunpack.c.l.b16 %v1328
    %v1461 = vunpack.c.l.b16 %v1329
    %v1462 = vunpack.c.l.b16 %v1330
    %v1463 = vunpack.c.l.b16 %v1331
    %v1464 = vunpack.c.l.b16 %v1332
    %v1465 = vunpack.c.l.b16 %v1333
    %v1466 = vunpack.c.l.b16 %v1334
    %v1467 = vunpack.c.l.b16 %v1335
    %v1468 = vpack.c.b16 %v1405, %v1404
    %v1469 = vpack.c.b16 %v1407, %v1406
    %v1470 = vpack.c.b16 %v1409, %v1408
    %v1471 = vpack.c.b16 %v1411, %v1410
    %v1472 = vpack.c.b16 %v1413, %v1412
    %v1473 = vpack.c.b16 %v1415, %v1414
    %v1474 = vpack.c.b16 %v1417, %v1416
    %v1475 = vpack.c.b16 %v1419, %v1418
    %v1476 = vpack.c.b16 %v1421, %v1420
    %v1477 = vpack.c.b16 %v1423, %v1422
    %v1478 = vpack.c.b16 %v1425, %v1424
    %v1479 = vpack.c.b16 %v1427, %v1426
    %v1480 = vpack.c.b16 %v1429, %v1428
    %v1481 = vpack.c.b16 %v1431, %v1430
    %v1482 = vpack.c.b16 %v1433, %v1432
    %v1483 = vpack.c.b16 %v1435, %v1434
    %v1484 = vpack.c.b16 %v1437, %v1436
    %v1485 = vpack.c.b16 %v1439, %v1438
    %v1486 = vpack.c.b16 %v1441, %v1440
    %v1487 = vpack.c.b16 %v1443, %v1442
    %v1488 = vpack.c.b16 %v1445, %v1444
    %v1489 = vpack.c.b16 %v1447, %v1446
    %v1490 = vpack.c.b16 %v1449, %v1448
    %v1491 = vpack.c.b16 %v1451, %v1450
    %v1492 = vpack.c.b16 %v1453, %v1452
    %v1493 = vpack.c.b16 %v1455, %v1454
    %v1494 = vpack.c.b16 %v1457, %v1456
    %v1495 = vpack.c.b16 %v1459, %v1458
    %v1496 = vpack.c.b16 %v1461, %v1460
    %v1497 = vpack.c.b16 %v1463, %v1462
    %v1498 = vpack.c.b16 %v1465, %v1464
    %v1499 = vpack.c.b16 %v1467, %v1466
    %1532 = vmatpush.bf16.msra.mxu0 %v1475
    %1533 = vmatpush.bf16.msra.mxu0 %v1474
    %1534 = vmatpush.bf16.msra.mxu0 %v1473
    %1535 = vmatpush.bf16.msra.mxu0 %v1472
    %1536 = vmatpush.bf16.msra.mxu0 %v1471
    %1537 = vmatpush.bf16.msra.mxu0 %v1470
    %1538 = vmatpush.bf16.msra.mxu0 %v1469
    %1539 = vmatpush.bf16.msra.mxu0 %v1468
    %1540 = vmatmul.bf16.gmra.mxu0 %v1268
    %v1541 = vpop.f32.mrf.mxu0
    %v1542 = vadd.f32 %v1338, %v1541
    %v1543 = vpop.f32.mrf.mxu0
    %1544 = vdwg.mxu0
    %1545 = vmatpush.bf16.msra.mxu0 %v1483
    %1546 = vmatpush.bf16.msra.mxu0 %v1482
    %1547 = vmatpush.bf16.msra.mxu0 %v1481
    %1548 = vmatpush.bf16.msra.mxu0 %v1480
    %1549 = vmatpush.bf16.msra.mxu0 %v1479
    %1550 = vmatpush.bf16.msra.mxu0 %v1478
    %1551 = vmatpush.bf16.msra.mxu0 %v1477
    %1552 = vmatpush.bf16.msra.mxu0 %v1476
    %1553 = vmatmul.bf16.gmra.mxu0 %v1269
    %v1554 = vpop.f32.mrf.mxu0
    %v1555 = vadd.f32 %v1542, %v1554
    %v1556 = vpop.f32.mrf.mxu0
    %1557 = vdwg.mxu0
    %1558 = vmatpush.bf16.msra.mxu0 %v1491
    %1559 = vmatpush.bf16.msra.mxu0 %v1490
    %1560 = vmatpush.bf16.msra.mxu0 %v1489
    %1561 = vmatpush.bf16.msra.mxu0 %v1488
    %1562 = vmatpush.bf16.msra.mxu0 %v1487
    %1563 = vmatpush.bf16.msra.mxu0 %v1486
    %1564 = vmatpush.bf16.msra.mxu0 %v1485
    %1565 = vmatpush.bf16.msra.mxu0 %v1484
    %1566 = vmatmul.bf16.gmra.mxu0 %v1270
    %v1567 = vpop.f32.mrf.mxu0
    %v1568 = vadd.f32 %v1555, %v1567
    %v1569 = vpop.f32.mrf.mxu0
    %1570 = vdwg.mxu0
    %1571 = vmatpush.bf16.msra.mxu0 %v1499
    %1572 = vmatpush.bf16.msra.mxu0 %v1498
    %1573 = vmatpush.bf16.msra.mxu0 %v1497
    %1574 = vmatpush.bf16.msra.mxu0 %v1496
    %1575 = vmatpush.bf16.msra.mxu0 %v1495
    %1576 = vmatpush.bf16.msra.mxu0 %v1494
    %1577 = vmatpush.bf16.msra.mxu0 %v1493
    %1578 = vmatpush.bf16.msra.mxu0 %v1492
    %1579 = vmatmul.bf16.gmra.mxu0 %v1271
    %v1580 = vpop.f32.mrf.mxu0
    %v1581 = vadd.f32 %v1568, %v1580
    %v1582 = vpop.f32.mrf.mxu0
    %1583 = vdwg.mxu0
    %1584 = vmax.xlane.f32.xlu0 %v1581
    %v1585 = vpop.xlane.xlu0 %1584
    %v1586 = vsub.f32 %v1581, %v1585
    %v1587 = vmul.f32 %v1586, 1.442695
    %v1588 = vpow.pop %v1587
    %1589 = vadd.xlane.f32.xlu0 %v1588
    %v1590 = vpop.xlane.xlu0 %1589
    %v1591 = vrcp.pop %v1590
    %v1592 = vmul.f32 %v1590, %v1591
    %v1593 = vsub.f32 1.0, %v1592
    %v1594 = vmul.f32 %v1591, %v1593
    %v1595 = vadd.f32 %v1591, %v1594
    %vm1596 = vweird.f32 %v1590
    %vm1597 = vweird.f32 %v1591
    %vm1598 = vmor %vm1596, %vm1597
    %v1599 = vsel %vm1598, %v1591, %v1595
    %v1600 = vand.u32 2147483647, %v1590
    %vm1601 = vcmp.eq.f32.partialorder %v1600, 8.507059e+37
    %v1602 = vand.u32 %v1590, 2147483648
    %v1603 = vor.u32 1.1754944e-38, %v1602
    %v1604 = vsel %vm1601, %v1603, %v1599
    %v1605 = vmul.f32 %v1588, %v1604
    %1606 = vst [vmem:[#allocation13] sm:$0xff] %v1605
    // Predicated region
    $region54: #{tpu_custom_call.1} parent=1 // pred_check
      _
    $region55: #{tpu_custom_call.1} parent=1 // pred_check_branch
      %1608 = sbr.rel (0) target = $region57
    $region56: #{tpu_custom_call.1} parent=1 // pred_region
      %1610 = vsyncadd [#allocation4], 0
      %s1612 = sshll.u32 [#allocation13], 4
      %s1613 = int_to_ptr.vmem [resolvable:$true] %s1612
      %s1614 = sshll.u32 %s7, 4
      %s1615 = int_to_ptr.hbm [resolvable:$true] %s1614
      %1617 = dma.vmem_to_hbm [thread:$0]  %s1613, 128, %s1615, [#allocation4]
    $region57: #{tpu_custom_call.1} parent=1 // pred_fallthru
      _
    // Predicated region
    $region58: #{tpu_custom_call.1} parent=1 // pred_check
      _
    $region59: #{tpu_custom_call.1} parent=1 // pred_check_branch
      %1619 = sbr.rel (0) target = $region61
    $region60: #{tpu_custom_call.1} parent=1 // pred_region
      %1621 = dma.done [#allocation4], 128
    $region61: #{tpu_custom_call.1} parent=1 // pred_fallthru
      _
    %1622 = vsyncpa [#allocation3], 1
    %1623 = vsyncpa [#allocation6], 1
    %1624 = vsyncpa [#allocation9], 1
    %1625 = vsyncpa [#allocation12], 1
    %1626 = vsyncpa [#allocation4], 1

</llo_original>
